<compile_context>
chip_gen: v7x
topology: tpu7x:2x2x1
jax: 0.10.0
libtpu: 0.0.40
codegen_flags: <defaults>
</compile_context>

<pallas_src>
import jax
import jax.numpy as jnp
from jax.experimental import pallas as pl
from jax.experimental.pallas import tpu as pltpu

PAD = 128       # padded hidden width (lanes)
N_IN = 9        # input features
N_OUT = 9       # output features
MAX_TB = 1024   # max batch-tile rows per grid step (well under VMEM limits)


def _round_up(n, m):
    return ((n + m - 1) // m) * m


def _dqn_kernel(x_ref, w_ref, b_ref, o_ref, xpad_ref):
    """One batch tile: x[TB, 9] -> o[TB, 9]."""
    f_in = x_ref.shape[1]
    f_out = o_ref.shape[1]

    # Zero-extend the narrow input to 128 lanes.  Re-zero every step: with
    # "parallel" semantics each TensorCore owns its own scratch instance and
    # starts at an arbitrary grid step, so a zero-on-first-step trick would
    # be wrong on v7x megacore.  The full-tile zero store is an unmasked vst
    # and is hidden under the MXU work.
    xpad_ref[...] = jnp.zeros(xpad_ref.shape, xpad_ref.dtype)
    xpad_ref[:, :f_in] = x_ref[...]
    x = xpad_ref[...]                                     # [TB, 128] bf16

    b = b_ref[...]                                        # [4, 128] f32 (hoisted once)

    # fc1 + relu   (dropout(0.5): identity in eval mode)
    h = jnp.dot(x, w_ref[0], preferred_element_type=jnp.float32)
    h = jnp.maximum(h + b[0:1, :], 0.0)
    # fc2 + relu
    h = jnp.dot(h.astype(jnp.bfloat16), w_ref[1], preferred_element_type=jnp.float32)
    h = jnp.maximum(h + b[1:2, :], 0.0)
    # fc3 + relu   (lanes 64..127 stay exactly zero: zero-padded weights + bias)
    h = jnp.dot(h.astype(jnp.bfloat16), w_ref[2], preferred_element_type=jnp.float32)
    h = jnp.maximum(h + b[2:3, :], 0.0)
    # fc4
    out = jnp.dot(h.astype(jnp.bfloat16), w_ref[3], preferred_element_type=jnp.float32)
    out = out + b[3:4, :]

    o_ref[...] = out[:, :f_out].astype(o_ref.dtype)


def prepare_params(params):
    """Pad + stack the (w, b) pairs ONCE, outside the hot forward path."""
    (w1, b1), (w2, b2), (w3, b3), (w4, b4) = params
    W = jnp.zeros((4, PAD, PAD), jnp.float32)
    W = W.at[0, :N_IN, :].set(w1)        # [9, 128]
    W = W.at[1, :, :].set(w2)            # [128, 128]
    W = W.at[2, :, :64].set(w3)          # [128, 64]
    W = W.at[3, :64, :N_OUT].set(w4)     # [64, 9]
    Bv = jnp.zeros((4, PAD), jnp.float32)
    Bv = Bv.at[0, :].set(b1)
    Bv = Bv.at[1, :].set(b2)
    Bv = Bv.at[2, :64].set(b3)
    Bv = Bv.at[3, :N_OUT].set(b4)
    return W.astype(jnp.bfloat16), Bv


@jax.jit
def dqn_forward(x, W, Bv):
    """x: [B, 9] float32 -> [B, 9] float32 (PyTorch DQN.forward, eval mode)."""
    batch = x.shape[0]
    # Batch tile: 16-row aligned (bf16 sublane tiling) or the full padded batch.
    tb = min(MAX_TB, _round_up(batch, 16))
    bp = _round_up(batch, tb)
    xp = jnp.pad(x, ((0, bp - batch), (0, 0))).astype(jnp.bfloat16)

    out = pl.pallas_call(
        _dqn_kernel,
        out_shape=jax.ShapeDtypeStruct((bp, N_OUT), jnp.float32),
        grid=(bp // tb,),
        in_specs=[
            pl.BlockSpec((tb, N_IN), lambda i: (i, 0)),        # x tile (narrow)
            pl.BlockSpec((4, PAD, PAD), lambda i: (0, 0, 0)),  # weights, resident
            pl.BlockSpec((4, PAD), lambda i: (0, 0)),          # biases, resident
        ],
        out_specs=pl.BlockSpec((tb, N_OUT), lambda i: (i, 0)),
        scratch_shapes=[pltpu.VMEM((tb, PAD), jnp.bfloat16)],
        compiler_params=pltpu.CompilerParams(
            dimension_semantics=("parallel",)),
    )(xp, W, Bv)
    return out[:batch]


def init_params(key):
    """Deterministic init mimicking torch.nn.Linear (uniform +-1/sqrt(fan_in))."""
    dims = [(9, 128), (128, 128), (128, 64), (64, 9)]
    params = []
    for (fan_in, fan_out) in dims:
        key, kw, kb = jax.random.split(key, 3)
        bound = 1.0 / jnp.sqrt(jnp.float32(fan_in))
        w = jax.random.uniform(kw, (fan_in, fan_out), jnp.float32, -bound, bound)
        b = jax.random.uniform(kb, (fan_out,), jnp.float32, -bound, bound)
        params.append((w, b))
    return params


def _reference(x, params):
    (w1, b1), (w2, b2), (w3, b3), (w4, b4) = params
    h = jnp.maximum(x @ w1 + b1, 0.0)
    h = jnp.maximum(h @ w2 + b2, 0.0)
    h = jnp.maximum(h @ w3 + b3, 0.0)
    return h @ w4 + b4


if __name__ == "__main__":
    key = jax.random.PRNGKey(0)
    kp, kx = jax.random.split(key)
    params = init_params(kp)
    W, Bv = prepare_params(params)   # pad/stack once, outside the forward

    # batch=2: single-tile path; batch=1040: multi-step grid (tb=1024, grid=2).
    for batch in (2, 1040):
        kx, k = jax.random.split(kx)
        x = jax.random.normal(k, (batch, N_IN), jnp.float32)

        out = jax.block_until_ready(dqn_forward(x, W, Bv))
        ref = _reference(x, params)

        assert out.shape == (batch, N_OUT), out.shape
        max_err = float(jnp.max(jnp.abs(out - ref)))
        # bf16 operands / f32 accumulation -> loosened tolerance vs f32 reference.
        assert jnp.allclose(out, ref, atol=5e-2, rtol=5e-2), max_err

    print("KERNEL_OK")
</pallas_src>

<mosaic_0001>
module attributes {stable_mosaic.version = 11 : i64} {
  func.func @_dqn_kernel(%arg0: i32, %arg1: memref<16x9xbf16, #tpu.memory_space<vmem>>, %arg2: memref<4x128x128xbf16, #tpu.memory_space<vmem>>, %arg3: memref<4x128xf32, #tpu.memory_space<vmem>>, %arg4: memref<16x9xf32, #tpu.memory_space<vmem>>, %arg5: memref<16x128xbf16, #tpu.memory_space<vmem>>) attributes {dimension_semantics = [#tpu.dimension_semantics<parallel>], iteration_bounds = array<i64: 1>, scalar_prefetch = 0 : i64, scratch_operands = 1 : i64, tpu.core_type = #tpu.core_type<tc>, window_params = [{transform_indices = @transform_0, window_bounds = array<i64: 16, 9>}, {pipeline_mode = #tpu.pipeline_mode<synchronous>, transform_indices = @transform_1, window_bounds = array<i64: 4, 128, 128>}, {pipeline_mode = #tpu.pipeline_mode<synchronous>, transform_indices = @transform_2, window_bounds = array<i64: 4, 128>}, {transform_indices = @transform_3, window_bounds = array<i64: 16, 9>}]} {
    %cst = arith.constant 0.000000e+00 : bf16
    %0 = vector.broadcast %cst : bf16 to vector<16x128xbf16>
    %c0 = arith.constant 0 : index
    %c0_0 = arith.constant 0 : index
    %1 = vector.load %arg5[%c0, %c0_0] : memref<16x128xbf16, #tpu.memory_space<vmem>>, vector<16x128xbf16>
    tpu.vector_store %arg5[%c0, %c0_0], %0 {strides = array<i32>} : memref<16x128xbf16, #tpu.memory_space<vmem>>, vector<16x128xbf16>,
    %c0_1 = arith.constant 0 : index
    %c0_2 = arith.constant 0 : index
    %2 = vector.load %arg1[%c0_1, %c0_2] : memref<16x9xbf16, #tpu.memory_space<vmem>>, vector<16x9xbf16>
    %c0_3 = arith.constant 0 : index
    %c0_4 = arith.constant 0 : index
    %3 = vector.load %arg5[%c0_3, %c0_4] : memref<16x128xbf16, #tpu.memory_space<vmem>>, vector<16x9xbf16>
    tpu.vector_store %arg5[%c0_3, %c0_4], %2 {strides = array<i32>} : memref<16x128xbf16, #tpu.memory_space<vmem>>, vector<16x9xbf16>,
    %c0_5 = arith.constant 0 : index
    %c0_6 = arith.constant 0 : index
    %4 = vector.load %arg5[%c0_5, %c0_6] : memref<16x128xbf16, #tpu.memory_space<vmem>>, vector<16x128xbf16>
    %c0_7 = arith.constant 0 : index
    %c0_8 = arith.constant 0 : index
    %5 = vector.load %arg3[%c0_7, %c0_8] : memref<4x128xf32, #tpu.memory_space<vmem>>, vector<4x128xf32>
    %c0_9 = arith.constant 0 : index
    %c0_10 = arith.constant 0 : index
    %c0_11 = arith.constant 0 : index
    %6 = vector.load %arg2[%c0_9, %c0_10, %c0_11] : memref<4x128x128xbf16, #tpu.memory_space<vmem>>, vector<1x128x128xbf16>
    %7 = vector.shape_cast %6 : vector<1x128x128xbf16> to vector<128x128xbf16>
    %cst_12 = arith.constant dense<0.000000e+00> : vector<16x128xf32>
    %8 = tpu.matmul %4, %7, %cst_12 {dimension_numbers = #tpu.dot_dimension_numbers<[1], [0], [0], [1], [0, 0, 1, 1], [], []>} : vector<16x128xbf16>, vector<128x128xbf16>, vector<16x128xf32> -> vector<16x128xf32>
    %9 = vector.extract_strided_slice %5 {offsets = [0, 0], sizes = [1, 128], strides = [1, 1]} : vector<4x128xf32> to vector<1x128xf32>
    %10 = vector.broadcast %9 : vector<1x128xf32> to vector<16x128xf32>
    %11 = arith.addf %8, %10 : vector<16x128xf32>
    %cst_13 = arith.constant 0.000000e+00 : f32
    %12 = vector.broadcast %cst_13 : f32 to vector<16x128xf32>
    %13 = arith.maximumf %11, %12 : vector<16x128xf32>
    %14 = arith.truncf %13 : vector<16x128xf32> to vector<16x128xbf16>
    %c1 = arith.constant 1 : index
    %c0_14 = arith.constant 0 : index
    %c0_15 = arith.constant 0 : index
    %15 = vector.load %arg2[%c1, %c0_14, %c0_15] : memref<4x128x128xbf16, #tpu.memory_space<vmem>>, vector<1x128x128xbf16>
    %16 = vector.shape_cast %15 : vector<1x128x128xbf16> to vector<128x128xbf16>
    %cst_16 = arith.constant dense<0.000000e+00> : vector<16x128xf32>
    %17 = tpu.matmul %14, %16, %cst_16 {dimension_numbers = #tpu.dot_dimension_numbers<[1], [0], [0], [1], [0, 0, 1, 1], [], []>} : vector<16x128xbf16>, vector<128x128xbf16>, vector<16x128xf32> -> vector<16x128xf32>
    %18 = vector.extract_strided_slice %5 {offsets = [1, 0], sizes = [1, 128], strides = [1, 1]} : vector<4x128xf32> to vector<1x128xf32>
    %19 = vector.broadcast %18 : vector<1x128xf32> to vector<16x128xf32>
    %20 = arith.addf %17, %19 : vector<16x128xf32>
    %cst_17 = arith.constant 0.000000e+00 : f32
    %21 = vector.broadcast %cst_17 : f32 to vector<16x128xf32>
    %22 = arith.maximumf %20, %21 : vector<16x128xf32>
    %23 = arith.truncf %22 : vector<16x128xf32> to vector<16x128xbf16>
    %c2 = arith.constant 2 : index
    %c0_18 = arith.constant 0 : index
    %c0_19 = arith.constant 0 : index
    %24 = vector.load %arg2[%c2, %c0_18, %c0_19] : memref<4x128x128xbf16, #tpu.memory_space<vmem>>, vector<1x128x128xbf16>
    %25 = vector.shape_cast %24 : vector<1x128x128xbf16> to vector<128x128xbf16>
    %cst_20 = arith.constant dense<0.000000e+00> : vector<16x128xf32>
    %26 = tpu.matmul %23, %25, %cst_20 {dimension_numbers = #tpu.dot_dimension_numbers<[1], [0], [0], [1], [0, 0, 1, 1], [], []>} : vector<16x128xbf16>, vector<128x128xbf16>, vector<16x128xf32> -> vector<16x128xf32>
    %27 = vector.extract_strided_slice %5 {offsets = [2, 0], sizes = [1, 128], strides = [1, 1]} : vector<4x128xf32> to vector<1x128xf32>
    %28 = vector.broadcast %27 : vector<1x128xf32> to vector<16x128xf32>
    %29 = arith.addf %26, %28 : vector<16x128xf32>
    %cst_21 = arith.constant 0.000000e+00 : f32
    %30 = vector.broadcast %cst_21 : f32 to vector<16x128xf32>
    %31 = arith.maximumf %29, %30 : vector<16x128xf32>
    %32 = arith.truncf %31 : vector<16x128xf32> to vector<16x128xbf16>
    %c3 = arith.constant 3 : index
    %c0_22 = arith.constant 0 : index
    %c0_23 = arith.constant 0 : index
    %33 = vector.load %arg2[%c3, %c0_22, %c0_23] : memref<4x128x128xbf16, #tpu.memory_space<vmem>>, vector<1x128x128xbf16>
    %34 = vector.shape_cast %33 : vector<1x128x128xbf16> to vector<128x128xbf16>
    %cst_24 = arith.constant dense<0.000000e+00> : vector<16x128xf32>
    %35 = tpu.matmul %32, %34, %cst_24 {dimension_numbers = #tpu.dot_dimension_numbers<[1], [0], [0], [1], [0, 0, 1, 1], [], []>} : vector<16x128xbf16>, vector<128x128xbf16>, vector<16x128xf32> -> vector<16x128xf32>
    %36 = vector.extract_strided_slice %5 {offsets = [3, 0], sizes = [1, 128], strides = [1, 1]} : vector<4x128xf32> to vector<1x128xf32>
    %37 = vector.broadcast %36 : vector<1x128xf32> to vector<16x128xf32>
    %38 = arith.addf %35, %37 : vector<16x128xf32>
    %39 = vector.extract_strided_slice %38 {offsets = [0, 0], sizes = [16, 9], strides = [1, 1]} : vector<16x128xf32> to vector<16x9xf32>
    %c0_25 = arith.constant 0 : index
    %c0_26 = arith.constant 0 : index
    %40 = vector.load %arg4[%c0_25, %c0_26] : memref<16x9xf32, #tpu.memory_space<vmem>>, vector<16x9xf32>
    tpu.vector_store %arg4[%c0_25, %c0_26], %39 {strides = array<i32>} : memref<16x9xf32, #tpu.memory_space<vmem>>, vector<16x9xf32>,
    return
  }
  func.func @transform_0(%arg0: i32) -> (i32, i32) {
    %c0_i32 = arith.constant 0 : i32
    %c0_i32_0 = arith.constant 0 : i32
    return %arg0, %c0_i32 : i32, i32
  }
  func.func @transform_1(%arg0: i32) -> (i32, i32, i32) {
    %c0_i32 = arith.constant 0 : i32
    %c0_i32_0 = arith.constant 0 : i32
    %c0_i32_1 = arith.constant 0 : i32
    %c0_i32_2 = arith.constant 0 : i32
    return %c0_i32, %c0_i32_0, %c0_i32_1 : i32, i32, i32
  }
  func.func @transform_2(%arg0: i32) -> (i32, i32) {
    %c0_i32 = arith.constant 0 : i32
    %c0_i32_0 = arith.constant 0 : i32
    %c0_i32_1 = arith.constant 0 : i32
    return %c0_i32, %c0_i32_0 : i32, i32
  }
  func.func @transform_3(%arg0: i32) -> (i32, i32) {
    %c0_i32 = arith.constant 0 : i32
    %c0_i32_0 = arith.constant 0 : i32
    return %arg0, %c0_i32 : i32, i32
  }
}

</mosaic_0001>

<llo_original>
// kernel: dqn_forward.1
$region0: #{dqn_forward.1}
  #allocation0 [shape = 'u32[]', space=smem, size = 0x4, offset = 0x4, fixed_abs, tag = 'smem constant byte address 0x4 - core index']
  #allocation1 [shape = 'u32[144,128]{1,0:T(1,128)}', space=vmem, size = 0x12000, scoped, tag = 'internal scratch']
  #allocation2 [shape = 'bf16[16,128]{1,0:T(16,128)(2,1)}', space=vmem, size = 0x1000, scoped, tag = 'scratch operand']
  %s0 = inlined_call_operand.vmem [shape: bf16[16,9], index: 0, kind: input, shape index: {}]
  %s1 = inlined_call_operand.hbm [shape: bf16[4,128,128], index: 1, kind: input, shape index: {}]
  %s2 = inlined_call_operand.vmem [shape: f32[4,128], index: 2, kind: input, shape index: {}]
  %s3 = inlined_call_operand.vmem [shape: f32[16,9], index: 3, kind: output, shape index: {}]
  %s4 = sld [smem:[#allocation0]]
  $region26: #{dqn_forward.1} parent=0
    _
  %s6 = ssub.s32 1, %s4
  %s7 = scalar_select 0, %s6, %s4
  $region1: #{dqn_forward.1} parent=0
    #allocation3 [shape = 'u8[131072]{0}', space=vmem, size = 0x20000, scoped, tag = 'input window, operand 1, single buffered']
    #allocation4 [shape = 's32[1]{0}', space=sflag, size = 0x4, scoped, tag = 'scoped memory for dqn_forward.1']
    %8 = vsyncpa [#allocation4], 0
    // Predicated region
    $region2: #{dqn_forward.1} parent=1 // pred_check
      _
    $region3: #{dqn_forward.1} parent=1 // pred_check_branch
      %10 = sbr.rel (0) target = $region5
    $region4: #{dqn_forward.1} parent=1 // pred_region
      _
    $region5: #{dqn_forward.1} parent=1 // pred_fallthru
      _
    // Predicated region
    $region6: #{dqn_forward.1} parent=1 // pred_check
      _
    $region7: #{dqn_forward.1} parent=1 // pred_check_branch
      %12 = sbr.rel (0) target = $region9
    $region8: #{dqn_forward.1} parent=1 // pred_region
      %s14 = ssub.s32 4096, 4096
      %15 = vsyncadd [#allocation4], %s14
      %s16 = sshll.u32 [#allocation3], 4
      %s17 = int_to_ptr.vmem [resolvable:$true] %s16
      %22 = dma.hbm_to_vmem [thread:$0]  %s1, 4096, %s17, [#allocation4], 64, 64, 4
    $region9: #{dqn_forward.1} parent=1 // pred_fallthru
      _
    // Predicated region
    $region10: #{dqn_forward.1} parent=1 // pred_check
      _
    $region11: #{dqn_forward.1} parent=1 // pred_check_branch
      %24 = sbr.rel (0) target = $region13
    $region12: #{dqn_forward.1} parent=1 // pred_region
      _
    $region13: #{dqn_forward.1} parent=1 // pred_fallthru
      _
    // Predicated region
    $region14: #{dqn_forward.1} parent=1 // pred_check
      _
    $region15: #{dqn_forward.1} parent=1 // pred_check_branch
      %26 = sbr.rel (0) target = $region17
    $region16: #{dqn_forward.1} parent=1 // pred_region
      %27 = dma.done [#allocation4], 4096
    $region17: #{dqn_forward.1} parent=1 // pred_fallthru
      _
    %29 = vst [vmem:[#allocation2] sm:$0xff] 0
    %v30 = vld [vmem:[%s0] sm:$0xf]
    %v31 = vld [vmem:[%s0 + $0x4] sm:$0xf]
    %v34 = vunpack.c.l.b16 %v30
    %v35 = vunpack.c.l.b16 %v31
    %v36 = vpack.c.b16 %v35, %v34
    %vm38 = vcmask 72704
    %39 = vst.msk [vmem:[#allocation2] sm:$0xff] %vm38, %v36
    %v40 = vld [vmem:[#allocation2] sm:$0xff]
    %v41 = vld [vmem:[%s2] sm:$0xf]
    %v42 = vld [vmem:[#allocation3] sm:$0xf]
    %v43 = vld [vmem:[#allocation3 + $0x4] sm:$0xf]
    %v44 = vld [vmem:[#allocation3 + $0x8] sm:$0xf]
    %v45 = vld [vmem:[#allocation3 + $0xc] sm:$0xf]
    %v46 = vld [vmem:[#allocation3 + $0x10] sm:$0xf]
    %v47 = vld [vmem:[#allocation3 + $0x14] sm:$0xf]
    %v48 = vld [vmem:[#allocation3 + $0x18] sm:$0xf]
    %v49 = vld [vmem:[#allocation3 + $0x1c] sm:$0xf]
    %v50 = vld [vmem:[#allocation3 + $0x20] sm:$0xf]
    %v51 = vld [vmem:[#allocation3 + $0x24] sm:$0xf]
    %v52 = vld [vmem:[#allocation3 + $0x28] sm:$0xf]
    %v53 = vld [vmem:[#allocation3 + $0x2c] sm:$0xf]
    %v54 = vld [vmem:[#allocation3 + $0x30] sm:$0xf]
    %v55 = vld [vmem:[#allocation3 + $0x34] sm:$0xf]
    %v56 = vld [vmem:[#allocation3 + $0x38] sm:$0xf]
    %v57 = vld [vmem:[#allocation3 + $0x3c] sm:$0xf]
    %v58 = vlaneseq
    %v59 = vshrl.u32 %v58, 7
    %v60 = vsub.s32 0, %v59
    %v61 = vrot.slane %v41, %v60
    %v78 = vunpack.c.l.b16 %v42
    %v79 = vunpack.c.l.b16 %v43
    %v80 = vunpack.c.l.b16 %v44
    %v81 = vunpack.c.l.b16 %v45
    %v82 = vunpack.c.l.b16 %v46
    %v83 = vunpack.c.l.b16 %v47
    %v84 = vunpack.c.l.b16 %v48
    %v85 = vunpack.c.l.b16 %v49
    %v86 = vunpack.c.l.b16 %v50
    %v87 = vunpack.c.l.b16 %v51
    %v88 = vunpack.c.l.b16 %v52
    %v89 = vunpack.c.l.b16 %v53
    %v90 = vunpack.c.l.b16 %v54
    %v91 = vunpack.c.l.b16 %v55
    %v92 = vunpack.c.l.b16 %v56
    %v93 = vunpack.c.l.b16 %v57
    %v94 = vpack.c.b16 %v79, %v78
    %v95 = vpack.c.b16 %v81, %v80
    %v96 = vpack.c.b16 %v83, %v82
    %v97 = vpack.c.b16 %v85, %v84
    %v98 = vpack.c.b16 %v87, %v86
    %v99 = vpack.c.b16 %v89, %v88
    %v100 = vpack.c.b16 %v91, %v90
    %v101 = vpack.c.b16 %v93, %v92
    %110 = vmatprep.subr.bf16.mxu0 0
    %111 = vmatpush1.bf16.msra.mxu0 %v94
    %112 = vmatprep.subr.bf16.mxu0 0
    %113 = vmatpush1.bf16.msra.mxu0 %v95
    %114 = vmatprep.subr.bf16.mxu0 0
    %115 = vmatpush1.bf16.msra.mxu0 %v96
    %116 = vmatprep.subr.bf16.mxu0 0
    %117 = vmatpush1.bf16.msra.mxu0 %v97
    %118 = vmatprep.subr.bf16.mxu0 0
    %119 = vmatpush1.bf16.msra.mxu0 %v98
    %120 = vmatprep.subr.bf16.mxu0 0
    %121 = vmatpush1.bf16.msra.mxu0 %v99
    %122 = vmatprep.subr.bf16.mxu0 0
    %123 = vmatpush1.bf16.msra.mxu0 %v100
    %124 = vmatprep.subr.bf16.mxu0 0
    %125 = vmatpush1.bf16.msra.mxu0 %v101
    %126 = vmatprep.subr.bf16.mxu0 0
    %127 = vmatpush1.bf16.msra.mxu0 0
    %128 = vmatprep.subr.bf16.mxu0 0
    %129 = vmatpush1.bf16.msra.mxu0 0
    %130 = vmatprep.subr.bf16.mxu0 0
    %131 = vmatpush1.bf16.msra.mxu0 0
    %132 = vmatprep.subr.bf16.mxu0 0
    %133 = vmatpush1.bf16.msra.mxu0 0
    %134 = vmatprep.subr.bf16.mxu0 0
    %135 = vmatpush1.bf16.msra.mxu0 0
    %136 = vmatprep.subr.bf16.mxu0 0
    %137 = vmatpush1.bf16.msra.mxu0 0
    %138 = vmatprep.subr.bf16.mxu0 0
    %139 = vmatpush1.bf16.msra.mxu0 0
    %140 = vmatprep.subr.bf16.mxu0 0
    %141 = vmatpush1.bf16.msra.mxu0 0
    %142 = vmatprep.mubr.bf16.mxu0 0
    %143 = vmatmul.mubr.bf16.gmra.mrb[0].mxu0 %v40
    %v144 = vpop.f32.mrb[0].mxu0
    %v145 = vadd.f32 %v61, %v144
    %v146 = vpop.f32.mrb[0].mxu0
    %v147 = vpop.f32.mrb[0].mxu0
    %v148 = vadd.f32 %v61, %v147
    %v149 = vpop.f32.mrb[0].mxu0
    %150 = vdwg.mxu0
    %v151 = vmax.f32 %v145, 0.0
    %v152 = vmax.f32 %v148, 0.0
    %v153 = vpack.c.bf16 %v152, %v151
    %s154 = scalar_lea.vmem [#allocation3], 64
    %v155 = vld [vmem:[%s154] sm:$0xf]
    %v156 = vld [vmem:[%s154 + $0x4] sm:$0xf]
    %v157 = vld [vmem:[%s154 + $0x8] sm:$0xf]
    %v158 = vld [vmem:[%s154 + $0xc] sm:$0xf]
    %v159 = vld [vmem:[%s154 + $0x10] sm:$0xf]
    %v160 = vld [vmem:[%s154 + $0x14] sm:$0xf]
    %v161 = vld [vmem:[%s154 + $0x18] sm:$0xf]
    %v162 = vld [vmem:[%s154 + $0x1c] sm:$0xf]
    %v163 = vld [vmem:[%s154 + $0x20] sm:$0xf]
    %v164 = vld [vmem:[%s154 + $0x24] sm:$0xf]
    %v165 = vld [vmem:[%s154 + $0x28] sm:$0xf]
    %v166 = vld [vmem:[%s154 + $0x2c] sm:$0xf]
    %v167 = vld [vmem:[%s154 + $0x30] sm:$0xf]
    %v168 = vld [vmem:[%s154 + $0x34] sm:$0xf]
    %v169 = vld [vmem:[%s154 + $0x38] sm:$0xf]
    %v170 = vld [vmem:[%s154 + $0x3c] sm:$0xf]
    %v171 = vlaneseq
    %v172 = vshrl.u32 %v171, 7
    %v173 = vsub.s32 1, %v172
    %v174 = vrot.slane %v41, %v173
    %v191 = vunpack.c.l.b16 %v155
    %v192 = vunpack.c.l.b16 %v156
    %v193 = vunpack.c.l.b16 %v157
    %v194 = vunpack.c.l.b16 %v158
    %v195 = vunpack.c.l.b16 %v159
    %v196 = vunpack.c.l.b16 %v160
    %v197 = vunpack.c.l.b16 %v161
    %v198 = vunpack.c.l.b16 %v162
    %v199 = vunpack.c.l.b16 %v163
    %v200 = vunpack.c.l.b16 %v164
    %v201 = vunpack.c.l.b16 %v165
    %v202 = vunpack.c.l.b16 %v166
    %v203 = vunpack.c.l.b16 %v167
    %v204 = vunpack.c.l.b16 %v168
    %v205 = vunpack.c.l.b16 %v169
    %v206 = vunpack.c.l.b16 %v170
    %v207 = vpack.c.b16 %v192, %v191
    %v208 = vpack.c.b16 %v194, %v193
    %v209 = vpack.c.b16 %v196, %v195
    %v210 = vpack.c.b16 %v198, %v197
    %v211 = vpack.c.b16 %v200, %v199
    %v212 = vpack.c.b16 %v202, %v201
    %v213 = vpack.c.b16 %v204, %v203
    %v214 = vpack.c.b16 %v206, %v205
    %223 = vmatprep.subr.bf16.mxu0 0
    %224 = vmatpush1.bf16.msra.mxu0 %v207
    %225 = vmatprep.subr.bf16.mxu0 0
    %226 = vmatpush1.bf16.msra.mxu0 %v208
    %227 = vmatprep.subr.bf16.mxu0 0
    %228 = vmatpush1.bf16.msra.mxu0 %v209
    %229 = vmatprep.subr.bf16.mxu0 0
    %230 = vmatpush1.bf16.msra.mxu0 %v210
    %231 = vmatprep.subr.bf16.mxu0 0
    %232 = vmatpush1.bf16.msra.mxu0 %v211
    %233 = vmatprep.subr.bf16.mxu0 0
    %234 = vmatpush1.bf16.msra.mxu0 %v212
    %235 = vmatprep.subr.bf16.mxu0 0
    %236 = vmatpush1.bf16.msra.mxu0 %v213
    %237 = vmatprep.subr.bf16.mxu0 0
    %238 = vmatpush1.bf16.msra.mxu0 %v214
    %239 = vmatprep.subr.bf16.mxu0 0
    %240 = vmatpush1.bf16.msra.mxu0 0
    %241 = vmatprep.subr.bf16.mxu0 0
    %242 = vmatpush1.bf16.msra.mxu0 0
    %243 = vmatprep.subr.bf16.mxu0 0
    %244 = vmatpush1.bf16.msra.mxu0 0
    %245 = vmatprep.subr.bf16.mxu0 0
    %246 = vmatpush1.bf16.msra.mxu0 0
    %247 = vmatprep.subr.bf16.mxu0 0
    %248 = vmatpush1.bf16.msra.mxu0 0
    %249 = vmatprep.subr.bf16.mxu0 0
    %250 = vmatpush1.bf16.msra.mxu0 0
    %251 = vmatprep.subr.bf16.mxu0 0
    %252 = vmatpush1.bf16.msra.mxu0 0
    %253 = vmatprep.subr.bf16.mxu0 0
    %254 = vmatpush1.bf16.msra.mxu0 0
    %255 = vmatprep.mubr.bf16.mxu0 0
    %256 = vmatmul.mubr.bf16.gmra.mrb[0].mxu0 %v153
    %v257 = vpop.f32.mrb[0].mxu0
    %v258 = vadd.f32 %v174, %v257
    %v259 = vpop.f32.mrb[0].mxu0
    %v260 = vpop.f32.mrb[0].mxu0
    %v261 = vadd.f32 %v174, %v260
    %v262 = vpop.f32.mrb[0].mxu0
    %263 = vdwg.mxu0
    %v264 = vmax.f32 %v258, 0.0
    %v265 = vmax.f32 %v261, 0.0
    %v266 = vpack.c.bf16 %v265, %v264
    %s267 = scalar_lea.vmem [#allocation3], 128
    %v268 = vld [vmem:[%s267] sm:$0xf]
    %v269 = vld [vmem:[%s267 + $0x4] sm:$0xf]
    %v270 = vld [vmem:[%s267 + $0x8] sm:$0xf]
    %v271 = vld [vmem:[%s267 + $0xc] sm:$0xf]
    %v272 = vld [vmem:[%s267 + $0x10] sm:$0xf]
    %v273 = vld [vmem:[%s267 + $0x14] sm:$0xf]
    %v274 = vld [vmem:[%s267 + $0x18] sm:$0xf]
    %v275 = vld [vmem:[%s267 + $0x1c] sm:$0xf]
    %v276 = vld [vmem:[%s267 + $0x20] sm:$0xf]
    %v277 = vld [vmem:[%s267 + $0x24] sm:$0xf]
    %v278 = vld [vmem:[%s267 + $0x28] sm:$0xf]
    %v279 = vld [vmem:[%s267 + $0x2c] sm:$0xf]
    %v280 = vld [vmem:[%s267 + $0x30] sm:$0xf]
    %v281 = vld [vmem:[%s267 + $0x34] sm:$0xf]
    %v282 = vld [vmem:[%s267 + $0x38] sm:$0xf]
    %v283 = vld [vmem:[%s267 + $0x3c] sm:$0xf]
    %v284 = vlaneseq
    %v285 = vshrl.u32 %v284, 7
    %v286 = vsub.s32 2, %v285
    %v287 = vrot.slane %v41, %v286
    %v304 = vunpack.c.l.b16 %v268
    %v305 = vunpack.c.l.b16 %v269
    %v306 = vunpack.c.l.b16 %v270
    %v307 = vunpack.c.l.b16 %v271
    %v308 = vunpack.c.l.b16 %v272
    %v309 = vunpack.c.l.b16 %v273
    %v310 = vunpack.c.l.b16 %v274
    %v311 = vunpack.c.l.b16 %v275
    %v312 = vunpack.c.l.b16 %v276
    %v313 = vunpack.c.l.b16 %v277
    %v314 = vunpack.c.l.b16 %v278
    %v315 = vunpack.c.l.b16 %v279
    %v316 = vunpack.c.l.b16 %v280
    %v317 = vunpack.c.l.b16 %v281
    %v318 = vunpack.c.l.b16 %v282
    %v319 = vunpack.c.l.b16 %v283
    %v320 = vpack.c.b16 %v305, %v304
    %v321 = vpack.c.b16 %v307, %v306
    %v322 = vpack.c.b16 %v309, %v308
    %v323 = vpack.c.b16 %v311, %v310
    %v324 = vpack.c.b16 %v313, %v312
    %v325 = vpack.c.b16 %v315, %v314
    %v326 = vpack.c.b16 %v317, %v316
    %v327 = vpack.c.b16 %v319, %v318
    %336 = vmatprep.subr.bf16.mxu0 0
    %337 = vmatpush1.bf16.msra.mxu0 %v320
    %338 = vmatprep.subr.bf16.mxu0 0
    %339 = vmatpush1.bf16.msra.mxu0 %v321
    %340 = vmatprep.subr.bf16.mxu0 0
    %341 = vmatpush1.bf16.msra.mxu0 %v322
    %342 = vmatprep.subr.bf16.mxu0 0
    %343 = vmatpush1.bf16.msra.mxu0 %v323
    %344 = vmatprep.subr.bf16.mxu0 0
    %345 = vmatpush1.bf16.msra.mxu0 %v324
    %346 = vmatprep.subr.bf16.mxu0 0
    %347 = vmatpush1.bf16.msra.mxu0 %v325
    %348 = vmatprep.subr.bf16.mxu0 0
    %349 = vmatpush1.bf16.msra.mxu0 %v326
    %350 = vmatprep.subr.bf16.mxu0 0
    %351 = vmatpush1.bf16.msra.mxu0 %v327
    %352 = vmatprep.subr.bf16.mxu0 0
    %353 = vmatpush1.bf16.msra.mxu0 0
    %354 = vmatprep.subr.bf16.mxu0 0
    %355 = vmatpush1.bf16.msra.mxu0 0
    %356 = vmatprep.subr.bf16.mxu0 0
    %357 = vmatpush1.bf16.msra.mxu0 0
    %358 = vmatprep.subr.bf16.mxu0 0
    %359 = vmatpush1.bf16.msra.mxu0 0
    %360 = vmatprep.subr.bf16.mxu0 0
    %361 = vmatpush1.bf16.msra.mxu0 0
    %362 = vmatprep.subr.bf16.mxu0 0
    %363 = vmatpush1.bf16.msra.mxu0 0
    %364 = vmatprep.subr.bf16.mxu0 0
    %365 = vmatpush1.bf16.msra.mxu0 0
    %366 = vmatprep.subr.bf16.mxu0 0
    %367 = vmatpush1.bf16.msra.mxu0 0
    %368 = vmatprep.mubr.bf16.mxu0 0
    %369 = vmatmul.mubr.bf16.gmra.mrb[0].mxu0 %v266
    %v370 = vpop.f32.mrb[0].mxu0
    %v371 = vadd.f32 %v287, %v370
    %v372 = vpop.f32.mrb[0].mxu0
    %v373 = vpop.f32.mrb[0].mxu0
    %v374 = vadd.f32 %v287, %v373
    %v375 = vpop.f32.mrb[0].mxu0
    %376 = vdwg.mxu0
    %v377 = vmax.f32 %v371, 0.0
    %v378 = vmax.f32 %v374, 0.0
    %v379 = vpack.c.bf16 %v378, %v377
    %s380 = scalar_lea.vmem [#allocation3], 192
    %v381 = vld [vmem:[%s380] sm:$0xf]
    %v382 = vld [vmem:[%s380 + $0x4] sm:$0xf]
    %v383 = vld [vmem:[%s380 + $0x8] sm:$0xf]
    %v384 = vld [vmem:[%s380 + $0xc] sm:$0xf]
    %v385 = vld [vmem:[%s380 + $0x10] sm:$0xf]
    %v386 = vld [vmem:[%s380 + $0x14] sm:$0xf]
    %v387 = vld [vmem:[%s380 + $0x18] sm:$0xf]
    %v388 = vld [vmem:[%s380 + $0x1c] sm:$0xf]
    %v389 = vld [vmem:[%s380 + $0x20] sm:$0xf]
    %v390 = vld [vmem:[%s380 + $0x24] sm:$0xf]
    %v391 = vld [vmem:[%s380 + $0x28] sm:$0xf]
    %v392 = vld [vmem:[%s380 + $0x2c] sm:$0xf]
    %v393 = vld [vmem:[%s380 + $0x30] sm:$0xf]
    %v394 = vld [vmem:[%s380 + $0x34] sm:$0xf]
    %v395 = vld [vmem:[%s380 + $0x38] sm:$0xf]
    %v396 = vld [vmem:[%s380 + $0x3c] sm:$0xf]
    %v397 = vlaneseq
    %v398 = vshrl.u32 %v397, 7
    %v399 = vsub.s32 3, %v398
    %v400 = vrot.slane %v41, %v399
    %v417 = vunpack.c.l.b16 %v381
    %v418 = vunpack.c.l.b16 %v382
    %v419 = vunpack.c.l.b16 %v383
    %v420 = vunpack.c.l.b16 %v384
    %v421 = vunpack.c.l.b16 %v385
    %v422 = vunpack.c.l.b16 %v386
    %v423 = vunpack.c.l.b16 %v387
    %v424 = vunpack.c.l.b16 %v388
    %v425 = vunpack.c.l.b16 %v389
    %v426 = vunpack.c.l.b16 %v390
    %v427 = vunpack.c.l.b16 %v391
    %v428 = vunpack.c.l.b16 %v392
    %v429 = vunpack.c.l.b16 %v393
    %v430 = vunpack.c.l.b16 %v394
    %v431 = vunpack.c.l.b16 %v395
    %v432 = vunpack.c.l.b16 %v396
    %v433 = vpack.c.b16 %v418, %v417
    %v434 = vpack.c.b16 %v420, %v419
    %v435 = vpack.c.b16 %v422, %v421
    %v436 = vpack.c.b16 %v424, %v423
    %v437 = vpack.c.b16 %v426, %v425
    %v438 = vpack.c.b16 %v428, %v427
    %v439 = vpack.c.b16 %v430, %v429
    %v440 = vpack.c.b16 %v432, %v431
    %449 = vmatprep.subr.bf16.mxu0 0
    %450 = vmatpush1.bf16.msra.mxu0 %v433
    %451 = vmatprep.subr.bf16.mxu0 0
    %452 = vmatpush1.bf16.msra.mxu0 %v434
    %453 = vmatprep.subr.bf16.mxu0 0
    %454 = vmatpush1.bf16.msra.mxu0 %v435
    %455 = vmatprep.subr.bf16.mxu0 0
    %456 = vmatpush1.bf16.msra.mxu0 %v436
    %457 = vmatprep.subr.bf16.mxu0 0
    %458 = vmatpush1.bf16.msra.mxu0 %v437
    %459 = vmatprep.subr.bf16.mxu0 0
    %460 = vmatpush1.bf16.msra.mxu0 %v438
    %461 = vmatprep.subr.bf16.mxu0 0
    %462 = vmatpush1.bf16.msra.mxu0 %v439
    %463 = vmatprep.subr.bf16.mxu0 0
    %464 = vmatpush1.bf16.msra.mxu0 %v440
    %465 = vmatprep.subr.bf16.mxu0 0
    %466 = vmatpush1.bf16.msra.mxu0 0
    %467 = vmatprep.subr.bf16.mxu0 0
    %468 = vmatpush1.bf16.msra.mxu0 0
    %469 = vmatprep.subr.bf16.mxu0 0
    %470 = vmatpush1.bf16.msra.mxu0 0
    %471 = vmatprep.subr.bf16.mxu0 0
    %472 = vmatpush1.bf16.msra.mxu0 0
    %473 = vmatprep.subr.bf16.mxu0 0
    %474 = vmatpush1.bf16.msra.mxu0 0
    %475 = vmatprep.subr.bf16.mxu0 0
    %476 = vmatpush1.bf16.msra.mxu0 0
    %477 = vmatprep.subr.bf16.mxu0 0
    %478 = vmatpush1.bf16.msra.mxu0 0
    %479 = vmatprep.subr.bf16.mxu0 0
    %480 = vmatpush1.bf16.msra.mxu0 0
    %481 = vmatprep.mubr.bf16.mxu0 0
    %482 = vmatmul.mubr.bf16.gmra.mrb[0].mxu0 %v379
    %v483 = vpop.f32.mrb[0].mxu0
    %v484 = vadd.f32 %v400, %v483
    %v485 = vpop.f32.mrb[0].mxu0
    %v486 = vpop.f32.mrb[0].mxu0
    %v487 = vadd.f32 %v400, %v486
    %v488 = vpop.f32.mrb[0].mxu0
    %489 = vdwg.mxu0
    %490 = vst.msk [vmem:[%s3] sm:$0xff] %vm38, %v484
    %491 = vst.msk [vmem:[%s3 + $0x8] sm:$0xff] %vm38, %v487
    // Predicated region
    $region18: #{dqn_forward.1} parent=1 // pred_check
      _
    $region19: #{dqn_forward.1} parent=1 // pred_check_branch
      %493 = sbr.rel (0) target = $region21
    $region20: #{dqn_forward.1} parent=1 // pred_region
      _
    $region21: #{dqn_forward.1} parent=1 // pred_fallthru
      _
    // Predicated region
    $region22: #{dqn_forward.1} parent=1 // pred_check
      _
    $region23: #{dqn_forward.1} parent=1 // pred_check_branch
      %495 = sbr.rel (0) target = $region25
    $region24: #{dqn_forward.1} parent=1 // pred_region
      _
    $region25: #{dqn_forward.1} parent=1 // pred_fallthru
      _
    %496 = vsyncpa [#allocation4], 1

</llo_original>
